<compile_context>
chip_gen: v7x
topology: tpu7x:2x2x1
jax: 0.10.0
libtpu: 0.0.40
codegen_flags: <defaults>
</compile_context>

<pallas_src>
import jax
import jax.numpy as jnp
from jax.experimental import pallas as pl
from jax.experimental.pallas import tpu as pltpu


def pen_max_kernel(x_ref, wg_ref, bg_ref, wl_ref, o_ref):
    # x_ref : (Bt, N, Din)   compute dtype (bf16)
    # wg_ref: (Din, Dout)    compute dtype
    # bg_ref: (1, Dout)      float32
    # wl_ref: (Din, Dout)    compute dtype
    # o_ref : (Bt, N, Dout)  output dtype (matches input x dtype)
    Bt, N, Din = x_ref.shape
    Dout = o_ref.shape[-1]

    x3 = x_ref[...]                                  # (Bt, N, Din)
    x2 = x3.reshape(Bt * N, Din)                     # flatten batch*set for one big matmul

    # Per-batch max over the set dimension (monotone: bf16 max == max then bf16).
    xm = jnp.max(x3, axis=1)                         # (Bt, Din)

    # Gamma(x): one tall MXU matmul, f32 accumulation.
    gamma = jnp.dot(x2, wg_ref[...],
                    preferred_element_type=jnp.float32)          # (Bt*N, Dout) f32

    # Lambda(xm): batched across Bt maxima (no bias).
    lam = jnp.dot(xm, wl_ref[...],
                  preferred_element_type=jnp.float32)            # (Bt, Dout) f32

    # Fold the Gamma bias into the subtracted term: out = gamma + (bg - lam).
    shift = bg_ref[...] - lam                                    # (Bt, Dout) f32

    out = gamma.reshape(Bt, N, Dout) + shift[:, None, :]         # broadcast over N
    o_ref[...] = out.astype(o_ref.dtype)


def _choose_block_b(B, N, target_rows=512):
    """Largest divisor of B whose slab stays near `target_rows` matmul rows,
    while keeping at least two grid steps (v7x has 2 TensorCores)."""
    divisors = [d for d in range(1, B + 1) if B % d == 0]
    two_step = [d for d in divisors if B // d >= 2]
    if two_step:
        divisors = two_step
    good = [d for d in divisors if d * N <= max(target_rows, N)]
    return max(good) if good else min(divisors)


def pen_max(x, w_gamma, b_gamma, w_lambda, *,
            block_b=None, compute_dtype=jnp.bfloat16):
    """x: (B, N, Din); w_*: (Din, Dout) (pre-transposed); b_gamma: (Dout,)
    -> (B, N, Dout), same dtype as x."""
    B, N, Din = x.shape
    Dout = w_gamma.shape[1]

    if block_b is None:
        block_b = _choose_block_b(B, N)
    assert B % block_b == 0, "block_b must divide the batch size"
    grid_b = B // block_b

    # Cast matmul operands to the compute dtype (bf16 MXU path); keep the bias
    # and all accumulation / epilogue math in f32.
    xc = x.astype(compute_dtype)
    wg = w_gamma.astype(compute_dtype)
    wl = w_lambda.astype(compute_dtype)
    bg = b_gamma.reshape(1, Dout).astype(jnp.float32)

    return pl.pallas_call(
        pen_max_kernel,
        out_shape=jax.ShapeDtypeStruct((B, N, Dout), x.dtype),
        grid_spec=pltpu.PrefetchScalarGridSpec(
            num_scalar_prefetch=0,
            grid=(grid_b,),
            in_specs=[
                # Batch-folded activation slab; (N, Din) equal the full trailing dims.
                pl.BlockSpec((block_b, N, Din), lambda b: (b, 0, 0)),
                # Grid-invariant weights / bias (constant index_map -> DMA'd once).
                pl.BlockSpec((Din, Dout), lambda b: (0, 0)),
                pl.BlockSpec((1, Dout), lambda b: (0, 0)),
                pl.BlockSpec((Din, Dout), lambda b: (0, 0)),
            ],
            out_specs=pl.BlockSpec((block_b, N, Dout), lambda b: (b, 0, 0)),
        ),
        compiler_params=pltpu.CompilerParams(
            dimension_semantics=("parallel",)),
    )(xc, wg, bg, wl)


if __name__ == "__main__":
    # Small shapes consistent with the module: (batch, set_size, in_dim) -> out_dim.
    B, N, Din, Dout = 8, 32, 64, 128

    key = jax.random.PRNGKey(0)
    kx, kwg, kbg, kwl = jax.random.split(key, 4)

    x = jax.random.normal(kx, (B, N, Din), dtype=jnp.float32)

    # nn.Linear-style init (weights kept in the transposed (in, out) layout).
    bound = 1.0 / (Din ** 0.5)
    w_gamma = jax.random.uniform(kwg, (Din, Dout), jnp.float32, -bound, bound)
    b_gamma = jax.random.uniform(kbg, (Dout,), jnp.float32, -bound, bound)
    w_lambda = jax.random.uniform(kwl, (Din, Dout), jnp.float32, -bound, bound)

    out = jax.block_until_ready(pen_max(x, w_gamma, b_gamma, w_lambda))

    # Pure-JAX reference with the same bf16 operand rounding, math in f32.
    xb = x.astype(jnp.bfloat16).astype(jnp.float32)
    wgb = w_gamma.astype(jnp.bfloat16).astype(jnp.float32)
    wlb = w_lambda.astype(jnp.bfloat16).astype(jnp.float32)
    xm = jnp.max(xb, axis=1, keepdims=True)                  # (B, 1, Din)
    ref = (xb @ wgb + b_gamma) - (xm @ wlb)                  # (B, N, Dout)

    assert out.shape == (B, N, Dout)
    assert out.dtype == x.dtype
    assert jnp.allclose(out, ref, atol=1e-2, rtol=1e-2)

    print("KERNEL_OK")
</pallas_src>

<mosaic_0001>
module attributes {stable_mosaic.version = 11 : i64} {
  func.func @pen_max_kernel(%arg0: i32, %arg1: memref<4x32x64xbf16, #tpu.memory_space<vmem>>, %arg2: memref<64x128xbf16, #tpu.memory_space<vmem>>, %arg3: memref<1x128xf32, #tpu.memory_space<vmem>>, %arg4: memref<64x128xbf16, #tpu.memory_space<vmem>>, %arg5: memref<4x32x128xf32, #tpu.memory_space<vmem>>) attributes {dimension_semantics = [#tpu.dimension_semantics<parallel>], iteration_bounds = array<i64: 2>, scalar_prefetch = 0 : i64, scratch_operands = 0 : i64, tpu.core_type = #tpu.core_type<tc>, window_params = [{transform_indices = @transform_0, window_bounds = array<i64: 4, 32, 64>}, {pipeline_mode = #tpu.pipeline_mode<synchronous>, transform_indices = @transform_1, window_bounds = array<i64: 64, 128>}, {pipeline_mode = #tpu.pipeline_mode<synchronous>, transform_indices = @transform_2, window_bounds = array<i64: 1, 128>}, {pipeline_mode = #tpu.pipeline_mode<synchronous>, transform_indices = @transform_3, window_bounds = array<i64: 64, 128>}, {transform_indices = @transform_4, window_bounds = array<i64: 4, 32, 128>}]} {
    %c0 = arith.constant 0 : index
    %c0_0 = arith.constant 0 : index
    %c0_1 = arith.constant 0 : index
    %0 = vector.load %arg1[%c0, %c0_0, %c0_1] : memref<4x32x64xbf16, #tpu.memory_space<vmem>>, vector<4x32x64xbf16>
    %1 = vector.shape_cast %0 : vector<4x32x64xbf16> to vector<128x64xbf16>
    %cst = arith.constant dense<0xFF80> : vector<4x64xbf16>
    %2 = vector.multi_reduction <maximumf>, %0, %cst [1] : vector<4x32x64xbf16> to vector<4x64xbf16>
    %c0_2 = arith.constant 0 : index
    %c0_3 = arith.constant 0 : index
    %3 = vector.load %arg2[%c0_2, %c0_3] : memref<64x128xbf16, #tpu.memory_space<vmem>>, vector<64x128xbf16>
    %cst_4 = arith.constant dense<0.000000e+00> : vector<128x128xf32>
    %4 = tpu.matmul %1, %3, %cst_4 {dimension_numbers = #tpu.dot_dimension_numbers<[1], [0], [0], [1], [0, 0, 1, 1], [], []>} : vector<128x64xbf16>, vector<64x128xbf16>, vector<128x128xf32> -> vector<128x128xf32>
    %c0_5 = arith.constant 0 : index
    %c0_6 = arith.constant 0 : index
    %5 = vector.load %arg4[%c0_5, %c0_6] : memref<64x128xbf16, #tpu.memory_space<vmem>>, vector<64x128xbf16>
    %cst_7 = arith.constant dense<0.000000e+00> : vector<4x128xf32>
    %6 = tpu.matmul %2, %5, %cst_7 {dimension_numbers = #tpu.dot_dimension_numbers<[1], [0], [0], [1], [0, 0, 1, 1], [], []>} : vector<4x64xbf16>, vector<64x128xbf16>, vector<4x128xf32> -> vector<4x128xf32>
    %c0_8 = arith.constant 0 : index
    %c0_9 = arith.constant 0 : index
    %7 = vector.load %arg3[%c0_8, %c0_9] : memref<1x128xf32, #tpu.memory_space<vmem>>, vector<1x128xf32>
    %8 = vector.broadcast %7 : vector<1x128xf32> to vector<4x128xf32>
    %9 = arith.subf %8, %6 : vector<4x128xf32>
    %10 = vector.shape_cast %4 : vector<128x128xf32> to vector<4x32x128xf32>
    %11 = vector.shape_cast %9 : vector<4x128xf32> to vector<4x1x128xf32>
    %12 = vector.broadcast %11 : vector<4x1x128xf32> to vector<4x32x128xf32>
    %13 = arith.addf %10, %12 : vector<4x32x128xf32>
    %c0_10 = arith.constant 0 : index
    %c0_11 = arith.constant 0 : index
    %c0_12 = arith.constant 0 : index
    %14 = vector.load %arg5[%c0_10, %c0_11, %c0_12] : memref<4x32x128xf32, #tpu.memory_space<vmem>>, vector<4x32x128xf32>
    tpu.vector_store %arg5[%c0_10, %c0_11, %c0_12], %13 {strides = array<i32>} : memref<4x32x128xf32, #tpu.memory_space<vmem>>, vector<4x32x128xf32>,
    return
  }
  func.func @transform_0(%arg0: i32) -> (i32, i32, i32) {
    %c0_i32 = arith.constant 0 : i32
    %c0_i32_0 = arith.constant 0 : i32
    %c0_i32_1 = arith.constant 0 : i32
    return %arg0, %c0_i32, %c0_i32_0 : i32, i32, i32
  }
  func.func @transform_1(%arg0: i32) -> (i32, i32) {
    %c0_i32 = arith.constant 0 : i32
    %c0_i32_0 = arith.constant 0 : i32
    %c0_i32_1 = arith.constant 0 : i32
    return %c0_i32, %c0_i32_0 : i32, i32
  }
  func.func @transform_2(%arg0: i32) -> (i32, i32) {
    %c0_i32 = arith.constant 0 : i32
    %c0_i32_0 = arith.constant 0 : i32
    %c0_i32_1 = arith.constant 0 : i32
    return %c0_i32, %c0_i32_0 : i32, i32
  }
  func.func @transform_3(%arg0: i32) -> (i32, i32) {
    %c0_i32 = arith.constant 0 : i32
    %c0_i32_0 = arith.constant 0 : i32
    %c0_i32_1 = arith.constant 0 : i32
    return %c0_i32, %c0_i32_0 : i32, i32
  }
  func.func @transform_4(%arg0: i32) -> (i32, i32, i32) {
    %c0_i32 = arith.constant 0 : i32
    %c0_i32_0 = arith.constant 0 : i32
    %c0_i32_1 = arith.constant 0 : i32
    return %arg0, %c0_i32, %c0_i32_0 : i32, i32, i32
  }
}

</mosaic_0001>

<llo_original>
// kernel: tpu_custom_call.1
$region0: #{tpu_custom_call.1}
  #allocation0 [shape = 'u32[]', space=smem, size = 0x4, offset = 0x4, fixed_abs, tag = 'smem constant byte address 0x4 - core index']
  #allocation1 [shape = 'u32[144,128]{1,0:T(1,128)}', space=vmem, size = 0x12000, scoped, tag = 'internal scratch']
  %s0 = inlined_call_operand.hbm [shape: bf16[8,32,64], index: 0, kind: input, shape index: {}]
  %s1 = inlined_call_operand.hbm [shape: bf16[64,128], index: 1, kind: input, shape index: {}]
  %s2 = inlined_call_operand.vmem [shape: f32[1,128], index: 2, kind: input, shape index: {}]
  %s3 = inlined_call_operand.hbm [shape: bf16[64,128], index: 3, kind: input, shape index: {}]
  %s4 = inlined_call_operand.hbm [shape: f32[8,32,128], index: 4, kind: output, shape index: {}]
  %s5 = sld [smem:[#allocation0]]
  $region61: #{tpu_custom_call.1} parent=0
    _
  %s7 = ssub.s32 1, %s5
  %s8 = scalar_select 0, %s7, %s5
  $region1: #{tpu_custom_call.1} parent=0
    #allocation2 [shape = 'u8[65536]{0}', space=vmem, size = 0x10000, scoped, tag = 'input window, operand 0']
    #allocation3 [shape = 's32[2]{0}', space=sflag, size = 0x8, scoped, tag = 'scoped memory for tpu_custom_call.1']
    #allocation4 [shape = 's32[2]{0}', space=sflag, size = 0x8, scoped, tag = 'scoped memory for tpu_custom_call.1']
    #allocation5 [shape = 'u8[16384]{0}', space=vmem, size = 0x4000, scoped, tag = 'input window, operand 1, single buffered']
    #allocation6 [shape = 's32[1]{0}', space=sflag, size = 0x4, scoped, tag = 'scoped memory for tpu_custom_call.1']
    #allocation7 [shape = 'u8[16384]{0}', space=vmem, size = 0x4000, scoped, tag = 'input window, operand 3, single buffered']
    #allocation8 [shape = 'u8[131072]{0}', space=vmem, size = 0x20000, scoped, tag = 'output window, operand 0']
    %9 = vsyncpa [#allocation3], 0
    %s10 = scalar_lea.sflag [#allocation3], 1
    %11 = vsyncpa %s10, 0
    %12 = vsyncpa [#allocation6], 0
    %13 = vsyncpa [#allocation4], 0
    %s14 = scalar_lea.sflag [#allocation4], 1
    %15 = vsyncpa %s14, 0
    loop: start=0, step=1, limit=4
    $region2: #{tpu_custom_call.1} parent=1 // loop_pre_header
      _
    $region3: #{tpu_custom_call.1} parent=1 // loop_header
      %s17 = sphi 0, %s21
      %p18 = scmp.ge.s32.totalorder %s17, 4
      %s27 = sphi 0, %s29
      %s30 = sphi 0, %s27
      %s31 = sphi 0, %s30
      %s47 = sphi 0, %s31
      %s51 = sphi 0, %s51
      %s53 = sphi 0, %s51
      %s54 = sphi 0, %s53
      %s68 = sphi 0, %s54
      %s72 = sphi 0, %s72
      %s74 = sphi 0, %s72
      %s75 = sphi 0, %s74
      %s89 = sphi 0, %s75
      %s93 = sphi 0, %s93
      %s95 = sphi 0, %s93
      %s96 = sphi 0, %s95
      %s110 = sphi 0, %s96
      %s116 = sphi 0, %s118
      %s119 = sphi 0, %s116
      %s120 = sphi 0, %s119
      %s136 = sphi 0, %s120
    $region4: #{tpu_custom_call.1} parent=1 // loop_header_branch
      %20 = sbr.rel (%p18) target = $region8
    $region5: #{tpu_custom_call.1} parent=1 // loop_body
      %s22 = ssub.s32 %s17, 1
      %s23 = ssub.s32 %s17, 2
      %s24 = sadd.s32 %s17, 1
      %s25 = ssub.s32 %s17, %s24
      %p26 = scmp.eq.s32.totalorder %s25, 0
      %s28 = sadd.s32 %s27, 1
      %s29 = scalar_select %p26, %s27, %s28
      %p32 = pneg %p26
      %p33 = scmp.eq.s32.totalorder %s17, 1
      %p34 = por %p32, %p33
      %p35 = scmp.ne.s32.totalorder %s27, %s30
      %p36 = scmp.eq.s32.totalorder %s17, 0
      %p37 = por %p35, %p36
      %p38 = scmp.ne.s32.totalorder %s27, %s30
      %p39 = scmp.eq.s32.totalorder %s22, 1
      %p40 = por %p38, %p39
      %p41 = scmp.ne.s32.totalorder %s30, %s31
      %p42 = scmp.eq.s32.totalorder %s22, 0
      %p43 = por %p41, %p42
      %p44 = scmp.ne.s32.totalorder %s30, %s31
      %p45 = scmp.eq.s32.totalorder %s23, 1
      %p46 = por %p44, %p45
      %p48 = scmp.ne.s32.totalorder %s31, %s47
      %p49 = scmp.eq.s32.totalorder %s23, 0
      %p50 = por %p48, %p49
      %s52 = sadd.s32 %s51, 1
      %p55 = scmp.eq.s32.totalorder %s17, 1
      %p56 = scmp.ne.s32.totalorder %s51, %s53
      %p57 = scmp.eq.s32.totalorder %s17, 0
      %p58 = por %p56, %p57
      %p59 = scmp.ne.s32.totalorder %s51, %s53
      %p60 = scmp.eq.s32.totalorder %s22, 1
      %p61 = por %p59, %p60
      %p62 = scmp.ne.s32.totalorder %s53, %s54
      %p63 = scmp.eq.s32.totalorder %s22, 0
      %p64 = por %p62, %p63
      %p65 = scmp.ne.s32.totalorder %s53, %s54
      %p66 = scmp.eq.s32.totalorder %s23, 1
      %p67 = por %p65, %p66
      %p69 = scmp.ne.s32.totalorder %s54, %s68
      %p70 = scmp.eq.s32.totalorder %s23, 0
      %p71 = por %p69, %p70
      %s73 = sadd.s32 %s72, 1
      %p76 = scmp.eq.s32.totalorder %s17, 1
      %p77 = scmp.ne.s32.totalorder %s72, %s74
      %p78 = scmp.eq.s32.totalorder %s17, 0
      %p79 = por %p77, %p78
      %p80 = scmp.ne.s32.totalorder %s72, %s74
      %p81 = scmp.eq.s32.totalorder %s22, 1
      %p82 = por %p80, %p81
      %p83 = scmp.ne.s32.totalorder %s74, %s75
      %p84 = scmp.eq.s32.totalorder %s22, 0
      %p85 = por %p83, %p84
      %p86 = scmp.ne.s32.totalorder %s74, %s75
      %p87 = scmp.eq.s32.totalorder %s23, 1
      %p88 = por %p86, %p87
      %p90 = scmp.ne.s32.totalorder %s75, %s89
      %p91 = scmp.eq.s32.totalorder %s23, 0
      %p92 = por %p90, %p91
      %s94 = sadd.s32 %s93, 1
      %p97 = scmp.eq.s32.totalorder %s17, 1
      %p98 = scmp.ne.s32.totalorder %s93, %s95
      %p99 = scmp.eq.s32.totalorder %s17, 0
      %p100 = por %p98, %p99
      %p101 = scmp.ne.s32.totalorder %s93, %s95
      %p102 = scmp.eq.s32.totalorder %s22, 1
      %p103 = por %p101, %p102
      %p104 = scmp.ne.s32.totalorder %s95, %s96
      %p105 = scmp.eq.s32.totalorder %s22, 0
      %p106 = por %p104, %p105
      %p107 = scmp.ne.s32.totalorder %s95, %s96
      %p108 = scmp.eq.s32.totalorder %s23, 1
      %p109 = por %p107, %p108
      %p111 = scmp.ne.s32.totalorder %s96, %s110
      %p112 = scmp.eq.s32.totalorder %s23, 0
      %p113 = por %p111, %p112
      %s114 = ssub.s32 %s17, %s24
      %p115 = scmp.eq.s32.totalorder %s114, 0
      %s117 = sadd.s32 %s116, 1
      %s118 = scalar_select %p115, %s116, %s117
      %p121 = pneg %p115
      %p122 = scmp.eq.s32.totalorder %s17, 1
      %p123 = por %p121, %p122
      %p124 = scmp.ne.s32.totalorder %s116, %s119
      %p125 = scmp.eq.s32.totalorder %s17, 0
      %p126 = por %p124, %p125
      %p127 = scmp.ne.s32.totalorder %s116, %s119
      %p128 = scmp.eq.s32.totalorder %s22, 1
      %p129 = por %p127, %p128
      %p130 = scmp.ne.s32.totalorder %s119, %s120
      %p131 = scmp.eq.s32.totalorder %s22, 0
      %p132 = por %p130, %p131
      %p133 = scmp.ne.s32.totalorder %s119, %s120
      %p134 = scmp.eq.s32.totalorder %s23, 1
      %p135 = por %p133, %p134
      %p137 = scmp.ne.s32.totalorder %s120, %s136
      %p138 = scmp.eq.s32.totalorder %s23, 0
      %p139 = por %p137, %p138
      %p140 = scmp.le.s32.totalorder 1, %s17
      %p141 = scmp.lt.s32.totalorder %s17, 3
      %p142 = pnand %p140, %p141
      %p143 = pneg %p142
      // Predicated region
      $region9: #{tpu_custom_call.1} parent=5 // pred_check
        _
      $region10: #{tpu_custom_call.1} parent=5 // pred_check_branch
        %145 = sbr.rel (%p142) target = $region12
      $region11: #{tpu_custom_call.1} parent=5 // pred_region
        %s146 = ssub.s32 %s17, 1
        // Predicated region
        $region13: #{tpu_custom_call.1} parent=11 // pred_check
          %p147 = pneg %p64
        $region14: #{tpu_custom_call.1} parent=11 // pred_check_branch
          %149 = sbr.rel (%p147) target = $region16
        $region15: #{tpu_custom_call.1} parent=11 // pred_region
          %s151 = ssub.s32 512, 512
          %152 = vsyncadd [#allocation6], %s151
          %s153 = sshll.u32 [#allocation5], 4
          %s154 = int_to_ptr.vmem [resolvable:$true] %s153
          %159 = dma.hbm_to_vmem [thread:$0]  %s1, 512, %s154, [#allocation6], 64, 64, 4
        $region16: #{tpu_custom_call.1} parent=11 // pred_fallthru
          _
        // Predicated region
        $region17: #{tpu_custom_call.1} parent=11 // pred_check
          %p160 = pneg %p85
        $region18: #{tpu_custom_call.1} parent=11 // pred_check_branch
          %162 = sbr.rel (%p160) target = $region20
        $region19: #{tpu_custom_call.1} parent=11 // pred_region
          _
        $region20: #{tpu_custom_call.1} parent=11 // pred_fallthru
          _
        // Predicated region
        $region21: #{tpu_custom_call.1} parent=11 // pred_check
          %p163 = pneg %p106
        $region22: #{tpu_custom_call.1} parent=11 // pred_check_branch
          %165 = sbr.rel (%p163) target = $region24
        $region23: #{tpu_custom_call.1} parent=11 // pred_region
          %s167 = ssub.s32 512, 512
          %168 = vsyncadd [#allocation6], %s167
          %s169 = sshll.u32 [#allocation7], 4
          %s170 = int_to_ptr.vmem [resolvable:$true] %s169
          %175 = dma.hbm_to_vmem [thread:$0]  %s3, 512, %s170, [#allocation6], 64, 64, 4
        $region24: #{tpu_custom_call.1} parent=11 // pred_fallthru
          _
      $region12: #{tpu_custom_call.1} parent=5 // pred_fallthru
        _
      %p176 = scmp.lt.s32.totalorder %s17, 2
      // Predicated region
      $region25: #{tpu_custom_call.1} parent=5 // pred_check
        %p177 = pneg %p176
      $region26: #{tpu_custom_call.1} parent=5 // pred_check_branch
        %179 = sbr.rel (%p177) target = $region28
      $region27: #{tpu_custom_call.1} parent=5 // pred_region
        // Predicated region
        $region29: #{tpu_custom_call.1} parent=27 // pred_check
          %p180 = pneg %p37
        $region30: #{tpu_custom_call.1} parent=27 // pred_check_branch
          %182 = sbr.rel (%p180) target = $region32
        $region31: #{tpu_custom_call.1} parent=27 // pred_region
          %s183 = sand.u32 %s27, 1
          %s184 = scalar_lea.sflag [#allocation3], %s183
          %s185 = sand.u32 %s27, 1
          %s186 = smul.addr %s185, 64
          %s187 = scalar_lea.vmem [#allocation2], %s186
          %s188 = smul.u32 4, %s17
          %s190 = ssub.s32 1024, 1024
          %191 = vsyncadd %s184, %s190
          %s192 = smul.addr %s188, 4
          %s193 = smul.addr %s192, 64
          %s194 = scalar_lea.hbm %s0, %s193
          %s195 = sshll.u32 %s187, 4
          %s196 = int_to_ptr.vmem [resolvable:$true] %s195
          %201 = dma.hbm_to_vmem [thread:$0]  %s194, 1024, %s196, %s184, 64, 64, 4
        $region32: #{tpu_custom_call.1} parent=27 // pred_fallthru
          _
      $region28: #{tpu_custom_call.1} parent=5 // pred_fallthru
        _
      %p202 = scmp.le.s32.totalorder 1, %s17
      %p203 = scmp.lt.s32.totalorder %s17, 3
      %p204 = pnand %p202, %p203
      %p205 = pneg %p204
      // Predicated region
      $region33: #{tpu_custom_call.1} parent=5 // pred_check
        _
      $region34: #{tpu_custom_call.1} parent=5 // pred_check_branch
        %207 = sbr.rel (%p204) target = $region36
      $region35: #{tpu_custom_call.1} parent=5 // pred_region
        %s208 = ssub.s32 %s17, 1
        %s209 = sand.u32 %s30, 1
        %s210 = scalar_lea.sflag [#allocation3], %s209
        %s211 = sand.u32 %s30, 1
        %s212 = smul.addr %s211, 64
        %s213 = scalar_lea.vmem [#allocation2], %s212
        // Predicated region
        $region37: #{tpu_custom_call.1} parent=35 // pred_check
          %p214 = pneg %p43
        $region38: #{tpu_custom_call.1} parent=35 // pred_check_branch
          %216 = sbr.rel (%p214) target = $region40
        $region39: #{tpu_custom_call.1} parent=35 // pred_region
          %217 = dma.done %s210, 1024
        $region40: #{tpu_custom_call.1} parent=35 // pred_fallthru
          _
        // Predicated region
        $region41: #{tpu_custom_call.1} parent=35 // pred_check
          %p218 = pneg %p64
        $region42: #{tpu_custom_call.1} parent=35 // pred_check_branch
          %220 = sbr.rel (%p218) target = $region44
        $region43: #{tpu_custom_call.1} parent=35 // pred_region
          %221 = dma.done [#allocation6], 512
        $region44: #{tpu_custom_call.1} parent=35 // pred_fallthru
          _
        // Predicated region
        $region45: #{tpu_custom_call.1} parent=35 // pred_check
          %p222 = pneg %p106
        $region46: #{tpu_custom_call.1} parent=35 // pred_check_branch
          %224 = sbr.rel (%p222) target = $region48
        $region47: #{tpu_custom_call.1} parent=35 // pred_region
          %225 = dma.done [#allocation6], 512
        $region48: #{tpu_custom_call.1} parent=35 // pred_fallthru
          _
        %s226 = sand.u32 %s30, 1
        %s227 = scalar_lea.sflag [#allocation3], %s226
        %s228 = sand.u32 %s30, 1
        %s229 = smul.addr %s228, 64
        %s230 = scalar_lea.vmem [#allocation2], %s229
        %p231 = pneg %p43
        %p232 = pneg %p40
        %p233 = pneg %p64
        %p234 = pneg %p61
        %p235 = pneg %p85
        %p236 = pneg %p82
        %p237 = pneg %p106
        %p238 = pneg %p103
        %p239 = pneg %p132
        %p240 = pneg %p129
        %s241 = sand.u32 %s119, 1
        %s242 = scalar_lea.sflag [#allocation4], %s241
        %s243 = sand.u32 %s119, 1
        %s244 = smul.addr %s243, 128
        %s245 = scalar_lea.vmem [#allocation8], %s244
        %s246 = smul.u32 4, %s22
        %s247 = smul.u32 4, %s22
        %v250 = vld [vmem:[%s213] sm:$0xf]
        %v251 = vld [vmem:[%s213 + $0x4] sm:$0xf]
        %v252 = vld [vmem:[%s213 + $0x8] sm:$0xf]
        %v253 = vld [vmem:[%s213 + $0xc] sm:$0xf]
        %v254 = vld [vmem:[%s213 + $0x10] sm:$0xf]
        %v255 = vld [vmem:[%s213 + $0x14] sm:$0xf]
        %v256 = vld [vmem:[%s213 + $0x18] sm:$0xf]
        %v257 = vld [vmem:[%s213 + $0x1c] sm:$0xf]
        %v258 = vld [vmem:[%s213 + $0x20] sm:$0xf]
        %v259 = vld [vmem:[%s213 + $0x24] sm:$0xf]
        %v260 = vld [vmem:[%s213 + $0x28] sm:$0xf]
        %v261 = vld [vmem:[%s213 + $0x2c] sm:$0xf]
        %v262 = vld [vmem:[%s213 + $0x30] sm:$0xf]
        %v263 = vld [vmem:[%s213 + $0x34] sm:$0xf]
        %v264 = vld [vmem:[%s213 + $0x38] sm:$0xf]
        %v265 = vld [vmem:[%s213 + $0x3c] sm:$0xf]
        %v282 = vunpack.c.l.b16 %v250
        %v283 = vunpack.c.l.b16 %v251
        %v284 = vunpack.c.l.b16 %v252
        %v285 = vunpack.c.l.b16 %v253
        %v286 = vunpack.c.l.b16 %v254
        %v287 = vunpack.c.l.b16 %v255
        %v288 = vunpack.c.l.b16 %v256
        %v289 = vunpack.c.l.b16 %v257
        %v290 = vunpack.c.l.b16 %v258
        %v291 = vunpack.c.l.b16 %v259
        %v292 = vunpack.c.l.b16 %v260
        %v293 = vunpack.c.l.b16 %v261
        %v294 = vunpack.c.l.b16 %v262
        %v295 = vunpack.c.l.b16 %v263
        %v296 = vunpack.c.l.b16 %v264
        %v297 = vunpack.c.l.b16 %v265
        %v298 = vpack.c.b16 %v283, %v282
        %v299 = vpack.c.b16 %v285, %v284
        %v300 = vpack.c.b16 %v287, %v286
        %v301 = vpack.c.b16 %v289, %v288
        %v302 = vpack.c.b16 %v291, %v290
        %v303 = vpack.c.b16 %v293, %v292
        %v304 = vpack.c.b16 %v295, %v294
        %v305 = vpack.c.b16 %v297, %v296
        %vm306 = vcmask 523264
        %v309 = vsel %vm306, %v298, 4286644096
        %v312 = vsel %vm306, %v299, 4286644096
        %v314 = vmax.bf16 %v309, %v312
        %v315 = vunpack.i.l.bf16 %v314
        %v316 = vunpack.i.h.bf16 %v314
        %v317 = vmax.f32 %v315, %v316
        %v318 = vrot.slane %v317, 4
        %v319 = vmax.f32 %v317, %v318
        %v320 = vrot.slane %v319, 2
        %v321 = vmax.f32 %v319, %v320
        %v322 = vrot.slane %v321, 1
        %v323 = vmax.f32 %v321, %v322
        %v324 = vpack.i.bf16 %v323, %v323
        %v326 = vsel %vm306, %v300, 4286644096
        %v329 = vsel %vm306, %v301, 4286644096
        %v331 = vmax.bf16 %v326, %v329
        %v332 = vunpack.i.l.bf16 %v331
        %v333 = vunpack.i.h.bf16 %v331
        %v334 = vmax.f32 %v332, %v333
        %v335 = vrot.slane %v334, 4
        %v336 = vmax.f32 %v334, %v335
        %v337 = vrot.slane %v336, 2
        %v338 = vmax.f32 %v336, %v337
        %v339 = vrot.slane %v338, 1
        %v340 = vmax.f32 %v338, %v339
        %v341 = vpack.i.bf16 %v340, %v340
        %v343 = vsel %vm306, %v302, 4286644096
        %v346 = vsel %vm306, %v303, 4286644096
        %v348 = vmax.bf16 %v343, %v346
        %v349 = vunpack.i.l.bf16 %v348
        %v350 = vunpack.i.h.bf16 %v348
        %v351 = vmax.f32 %v349, %v350
        %v352 = vrot.slane %v351, 4
        %v353 = vmax.f32 %v351, %v352
        %v354 = vrot.slane %v353, 2
        %v355 = vmax.f32 %v353, %v354
        %v356 = vrot.slane %v355, 1
        %v357 = vmax.f32 %v355, %v356
        %v358 = vpack.i.bf16 %v357, %v357
        %v360 = vsel %vm306, %v304, 4286644096
        %v363 = vsel %vm306, %v305, 4286644096
        %v365 = vmax.bf16 %v360, %v363
        %v366 = vunpack.i.l.bf16 %v365
        %v367 = vunpack.i.h.bf16 %v365
        %v368 = vmax.f32 %v366, %v367
        %v369 = vrot.slane %v368, 4
        %v370 = vmax.f32 %v368, %v369
        %v371 = vrot.slane %v370, 2
        %v372 = vmax.f32 %v370, %v371
        %v373 = vrot.slane %v372, 1
        %v374 = vmax.f32 %v372, %v373
        %v375 = vpack.i.bf16 %v374, %v374
        %v376 = vld [vmem:[#allocation5] sm:$0xf]
        %v377 = vld [vmem:[#allocation5 + $0x4] sm:$0xf]
        %v378 = vld [vmem:[#allocation5 + $0x8] sm:$0xf]
        %v379 = vld [vmem:[#allocation5 + $0xc] sm:$0xf]
        %v380 = vld [vmem:[#allocation5 + $0x10] sm:$0xf]
        %v381 = vld [vmem:[#allocation5 + $0x14] sm:$0xf]
        %v382 = vld [vmem:[#allocation5 + $0x18] sm:$0xf]
        %v383 = vld [vmem:[#allocation5 + $0x1c] sm:$0xf]
        %v392 = vunpack.c.l.b16 %v376
        %v393 = vunpack.c.l.b16 %v377
        %v394 = vunpack.c.l.b16 %v378
        %v395 = vunpack.c.l.b16 %v379
        %v396 = vunpack.c.l.b16 %v380
        %v397 = vunpack.c.l.b16 %v381
        %v398 = vunpack.c.l.b16 %v382
        %v399 = vunpack.c.l.b16 %v383
        %v400 = vpack.c.b16 %v393, %v392
        %v401 = vpack.c.b16 %v395, %v394
        %v402 = vpack.c.b16 %v397, %v396
        %v403 = vpack.c.b16 %v399, %v398
        %v408 = vsel %vm306, %v298, 0
        %v410 = vsel %vm306, %v299, 0
        %v412 = vsel %vm306, %v300, 0
        %v414 = vsel %vm306, %v301, 0
        %v416 = vsel %vm306, %v302, 0
        %v418 = vsel %vm306, %v303, 0
        %v420 = vsel %vm306, %v304, 0
        %v422 = vsel %vm306, %v305, 0
        %424 = vmatprep.subr.bf16.mxu0 0
        %425 = vmatpush1.bf16.msra.mxu0 %v400
        %426 = vmatprep.subr.bf16.mxu0 0
        %427 = vmatpush1.bf16.msra.mxu0 %v401
        %428 = vmatprep.subr.bf16.mxu0 0
        %429 = vmatpush1.bf16.msra.mxu0 %v402
        %430 = vmatprep.subr.bf16.mxu0 0
        %431 = vmatpush1.bf16.msra.mxu0 %v403
        %432 = vmatprep.subr.bf16.mxu0 0
        %433 = vmatpush1.bf16.msra.mxu0 0
        %434 = vmatprep.subr.bf16.mxu0 0
        %435 = vmatpush1.bf16.msra.mxu0 0
        %436 = vmatprep.subr.bf16.mxu0 0
        %437 = vmatpush1.bf16.msra.mxu0 0
        %438 = vmatprep.subr.bf16.mxu0 0
        %439 = vmatpush1.bf16.msra.mxu0 0
        %440 = vmatprep.subr.bf16.mxu0 0
        %441 = vmatpush1.bf16.msra.mxu0 0
        %442 = vmatprep.subr.bf16.mxu0 0
        %443 = vmatpush1.bf16.msra.mxu0 0
        %444 = vmatprep.subr.bf16.mxu0 0
        %445 = vmatpush1.bf16.msra.mxu0 0
        %446 = vmatprep.subr.bf16.mxu0 0
        %447 = vmatpush1.bf16.msra.mxu0 0
        %448 = vmatprep.subr.bf16.mxu0 0
        %449 = vmatpush1.bf16.msra.mxu0 0
        %450 = vmatprep.subr.bf16.mxu0 0
        %451 = vmatpush1.bf16.msra.mxu0 0
        %452 = vmatprep.subr.bf16.mxu0 0
        %453 = vmatpush1.bf16.msra.mxu0 0
        %454 = vmatprep.subr.bf16.mxu0 0
        %455 = vmatpush1.bf16.msra.mxu0 0
        %456 = vmatprep.mubr.bf16.mxu0 0
        %457 = vmatmul.mubr.bf16.gmra.mrb[0].mxu0 %v408
        %v458 = vpop.f32.mrb[0].mxu0
        %v459 = vadd.f32 0.0, %v458
        %v460 = vpop.f32.mrb[0].mxu0
        %v461 = vpop.f32.mrb[0].mxu0
        %v462 = vadd.f32 0.0, %v461
        %v463 = vpop.f32.mrb[0].mxu0
        %464 = vmatprep.mubr.bf16.mxu0 0
        %465 = vmatmul.mubr.bf16.gmra.mrb[0].mxu0 %v410
        %v466 = vpop.f32.mrb[0].mxu0
        %v467 = vadd.f32 0.0, %v466
        %v468 = vpop.f32.mrb[0].mxu0
        %v469 = vpop.f32.mrb[0].mxu0
        %v470 = vadd.f32 0.0, %v469
        %v471 = vpop.f32.mrb[0].mxu0
        %472 = vmatprep.mubr.bf16.mxu0 0
        %473 = vmatmul.mubr.bf16.gmra.mrb[0].mxu0 %v412
        %v474 = vpop.f32.mrb[0].mxu0
        %v475 = vadd.f32 0.0, %v474
        %v476 = vpop.f32.mrb[0].mxu0
        %v477 = vpop.f32.mrb[0].mxu0
        %v478 = vadd.f32 0.0, %v477
        %v479 = vpop.f32.mrb[0].mxu0
        %480 = vmatprep.mubr.bf16.mxu0 0
        %481 = vmatmul.mubr.bf16.gmra.mrb[0].mxu0 %v414
        %v482 = vpop.f32.mrb[0].mxu0
        %v483 = vadd.f32 0.0, %v482
        %v484 = vpop.f32.mrb[0].mxu0
        %v485 = vpop.f32.mrb[0].mxu0
        %v486 = vadd.f32 0.0, %v485
        %v487 = vpop.f32.mrb[0].mxu0
        %488 = vmatprep.mubr.bf16.mxu0 0
        %489 = vmatmul.mubr.bf16.gmra.mrb[0].mxu0 %v416
        %v490 = vpop.f32.mrb[0].mxu0
        %v491 = vadd.f32 0.0, %v490
        %v492 = vpop.f32.mrb[0].mxu0
        %v493 = vpop.f32.mrb[0].mxu0
        %v494 = vadd.f32 0.0, %v493
        %v495 = vpop.f32.mrb[0].mxu0
        %496 = vmatprep.mubr.bf16.mxu0 0
        %497 = vmatmul.mubr.bf16.gmra.mrb[0].mxu0 %v418
        %v498 = vpop.f32.mrb[0].mxu0
        %v499 = vadd.f32 0.0, %v498
        %v500 = vpop.f32.mrb[0].mxu0
        %v501 = vpop.f32.mrb[0].mxu0
        %v502 = vadd.f32 0.0, %v501
        %v503 = vpop.f32.mrb[0].mxu0
        %504 = vmatprep.mubr.bf16.mxu0 0
        %505 = vmatmul.mubr.bf16.gmra.mrb[0].mxu0 %v420
        %v506 = vpop.f32.mrb[0].mxu0
        %v507 = vadd.f32 0.0, %v506
        %v508 = vpop.f32.mrb[0].mxu0
        %v509 = vpop.f32.mrb[0].mxu0
        %v510 = vadd.f32 0.0, %v509
        %v511 = vpop.f32.mrb[0].mxu0
        %512 = vmatprep.mubr.bf16.mxu0 0
        %513 = vmatmul.mubr.bf16.gmra.mrb[0].mxu0 %v422
        %v514 = vpop.f32.mrb[0].mxu0
        %v515 = vadd.f32 0.0, %v514
        %v516 = vpop.f32.mrb[0].mxu0
        %v517 = vpop.f32.mrb[0].mxu0
        %v518 = vadd.f32 0.0, %v517
        %v519 = vpop.f32.mrb[0].mxu0
        %520 = vdwg.mxu0
        %v521 = vld [vmem:[#allocation7] sm:$0xf]
        %v522 = vld [vmem:[#allocation7 + $0x4] sm:$0xf]
        %v523 = vld [vmem:[#allocation7 + $0x8] sm:$0xf]
        %v524 = vld [vmem:[#allocation7 + $0xc] sm:$0xf]
        %v525 = vld [vmem:[#allocation7 + $0x10] sm:$0xf]
        %v526 = vld [vmem:[#allocation7 + $0x14] sm:$0xf]
        %v527 = vld [vmem:[#allocation7 + $0x18] sm:$0xf]
        %v528 = vld [vmem:[#allocation7 + $0x1c] sm:$0xf]
        %v533 = vunpack.c.l.b16 %v324
        %v534 = vunpack.c.l.b16 %v341
        %v535 = vunpack.c.l.b16 %v358
        %v536 = vunpack.c.l.b16 %v375
        %vm537 = vcmask 1041409
        %v538 = vsel %vm537, %v534, %v533
        %vm539 = vcmask 1042434
        %v540 = vsel %vm539, %v535, %v538
        %vm541 = vcmask 1043459
        %v542 = vsel %vm541, %v536, %v540
        %v543 = vpack.c.b16 %v542, %v542
        %v552 = vunpack.c.l.b16 %v521
        %v553 = vunpack.c.l.b16 %v522
        %v554 = vunpack.c.l.b16 %v523
        %v555 = vunpack.c.l.b16 %v524
        %v556 = vunpack.c.l.b16 %v525
        %v557 = vunpack.c.l.b16 %v526
        %v558 = vunpack.c.l.b16 %v527
        %v559 = vunpack.c.l.b16 %v528
        %v560 = vpack.c.b16 %v553, %v552
        %v561 = vpack.c.b16 %v555, %v554
        %v562 = vpack.c.b16 %v557, %v556
        %v563 = vpack.c.b16 %v559, %v558
        %v569 = vsel %vm306, %v543, 0
        %571 = vmatprep.subr.bf16.mxu0 0
        %572 = vmatpush1.bf16.msra.mxu0 %v560
        %573 = vmatprep.subr.bf16.mxu0 0
        %574 = vmatpush1.bf16.msra.mxu0 %v561
        %575 = vmatprep.subr.bf16.mxu0 0
        %576 = vmatpush1.bf16.msra.mxu0 %v562
        %577 = vmatprep.subr.bf16.mxu0 0
        %578 = vmatpush1.bf16.msra.mxu0 %v563
        %579 = vmatprep.subr.bf16.mxu0 0
        %580 = vmatpush1.bf16.msra.mxu0 0
        %581 = vmatprep.subr.bf16.mxu0 0
        %582 = vmatpush1.bf16.msra.mxu0 0
        %583 = vmatprep.subr.bf16.mxu0 0
        %584 = vmatpush1.bf16.msra.mxu0 0
        %585 = vmatprep.subr.bf16.mxu0 0
        %586 = vmatpush1.bf16.msra.mxu0 0
        %587 = vmatprep.subr.bf16.mxu0 0
        %588 = vmatpush1.bf16.msra.mxu0 0
        %589 = vmatprep.subr.bf16.mxu0 0
        %590 = vmatpush1.bf16.msra.mxu0 0
        %591 = vmatprep.subr.bf16.mxu0 0
        %592 = vmatpush1.bf16.msra.mxu0 0
        %593 = vmatprep.subr.bf16.mxu0 0
        %594 = vmatpush1.bf16.msra.mxu0 0
        %595 = vmatprep.subr.bf16.mxu0 0
        %596 = vmatpush1.bf16.msra.mxu0 0
        %597 = vmatprep.subr.bf16.mxu0 0
        %598 = vmatpush1.bf16.msra.mxu0 0
        %599 = vmatprep.subr.bf16.mxu0 0
        %600 = vmatpush1.bf16.msra.mxu0 0
        %601 = vmatprep.subr.bf16.mxu0 0
        %602 = vmatpush1.bf16.msra.mxu0 0
        %603 = vmatprep.mubr.bf16.mxu0 0
        %604 = vmatmul.mubr.bf16.gmra.mrb[0].mxu0 %v569
        %v605 = vpop.f32.mrb[0].mxu0
        %v606 = vadd.f32 0.0, %v605
        %v607 = vpop.f32.mrb[0].mxu0
        %v608 = vpop.f32.mrb[0].mxu0
        %v609 = vpop.f32.mrb[0].mxu0
        %610 = vdwg.mxu0
        %v611 = vld [vmem:[%s2] sm:$0x1]
        %v613 = vlaneseq
        %v614 = vshrl.u32 %v613, 7
        %v615 = vsub.s32 0, %v614
        %v616 = vrot.slane %v611, %v615
        %v618 = vsub.f32 %v616, %v606
        %v621 = vunpack.c.l.s4 1966171168
        %v622 = vunpack.c.0.s8 %v621
        %v623 = vlaneseq
        %v624 = vshrl.u32 %v623, 7
        %v625 = vsub.s32 %v622, %v624
        %v626 = vrot.slane %v618, %v625
        %v627 = vcombine.high %v626, %v626
        %v629 = vunpack.c.l.s4 1966171168
        %v630 = vunpack.c.0.s8 %v629
        %v631 = vlaneseq
        %v632 = vshrl.u32 %v631, 7
        %v633 = vsub.s32 %v630, %v632
        %v634 = vrot.slane %v626, %v633
        %v636 = vunpack.c.l.s4 1966171168
        %v637 = vunpack.c.0.s8 %v636
        %v638 = vlaneseq
        %v639 = vshrl.u32 %v638, 7
        %v640 = vsub.s32 %v637, %v639
        %v641 = vrot.slane %v627, %v640
        %v642 = vcombine.high %v634, %v634
        %v643 = vcombine.high %v641, %v641
        %v644 = vlaneseq
        %v645 = vshrl.u32 %v644, 7
        %v646 = vsub.s32 0, %v645
        %v647 = vrot.slane %v634, %v646
        %v648 = vlaneseq
        %v649 = vshrl.u32 %v648, 7
        %v650 = vsub.s32 0, %v649
        %v651 = vrot.slane %v641, %v650
        %v652 = vlaneseq
        %v653 = vshrl.u32 %v652, 7
        %v654 = vsub.s32 0, %v653
        %v655 = vrot.slane %v642, %v654
        %v656 = vlaneseq
        %v657 = vshrl.u32 %v656, 7
        %v658 = vsub.s32 0, %v657
        %v659 = vrot.slane %v643, %v658
        %v664 = vadd.f32 %v459, %v647
        %v665 = vadd.f32 %v462, %v647
        %v666 = vadd.f32 %v467, %v647
        %v667 = vadd.f32 %v470, %v647
        %v668 = vadd.f32 %v475, %v651
        %v669 = vadd.f32 %v478, %v651
        %v670 = vadd.f32 %v483, %v651
        %v671 = vadd.f32 %v486, %v651
        %v672 = vadd.f32 %v491, %v655
        %v673 = vadd.f32 %v494, %v655
        %v674 = vadd.f32 %v499, %v655
        %v675 = vadd.f32 %v502, %v655
        %v676 = vadd.f32 %v507, %v659
        %v677 = vadd.f32 %v510, %v659
        %v678 = vadd.f32 %v515, %v659
        %v679 = vadd.f32 %v518, %v659
        %680 = vst [vmem:[%s245] sm:$0xff] %v664
        %681 = vst [vmem:[%s245 + $0x8] sm:$0xff] %v665
        %682 = vst [vmem:[%s245 + $0x10] sm:$0xff] %v666
        %683 = vst [vmem:[%s245 + $0x18] sm:$0xff] %v667
        %684 = vst [vmem:[%s245 + $0x20] sm:$0xff] %v668
        %685 = vst [vmem:[%s245 + $0x28] sm:$0xff] %v669
        %686 = vst [vmem:[%s245 + $0x30] sm:$0xff] %v670
        %687 = vst [vmem:[%s245 + $0x38] sm:$0xff] %v671
        %688 = vst [vmem:[%s245 + $0x40] sm:$0xff] %v672
        %689 = vst [vmem:[%s245 + $0x48] sm:$0xff] %v673
        %690 = vst [vmem:[%s245 + $0x50] sm:$0xff] %v674
        %691 = vst [vmem:[%s245 + $0x58] sm:$0xff] %v675
        %692 = vst [vmem:[%s245 + $0x60] sm:$0xff] %v676
        %693 = vst [vmem:[%s245 + $0x68] sm:$0xff] %v677
        %694 = vst [vmem:[%s245 + $0x70] sm:$0xff] %v678
        %695 = vst [vmem:[%s245 + $0x78] sm:$0xff] %v679
        %s696 = sand.u32 %s119, 1
        %s697 = scalar_lea.sflag [#allocation4], %s696
        %s698 = sand.u32 %s119, 1
        %s699 = smul.addr %s698, 128
        %s700 = scalar_lea.vmem [#allocation8], %s699
        // Predicated region
        $region49: #{tpu_custom_call.1} parent=35 // pred_check
          %p701 = pneg %p129
        $region50: #{tpu_custom_call.1} parent=35 // pred_check_branch
          %703 = sbr.rel (%p701) target = $region52
        $region51: #{tpu_custom_call.1} parent=35 // pred_region
          %s704 = smul.u32 4, %s22
          %s706 = ssub.s32 2048, 2048
          %707 = vsyncadd %s697, %s706
          %s708 = smul.addr %s704, 4
          %s709 = smul.addr %s708, 128
          %s710 = scalar_lea.hbm %s4, %s709
          %s711 = sshll.u32 %s700, 4
          %s712 = int_to_ptr.vmem [resolvable:$true] %s711
          %717 = dma.vmem_to_hbm [thread:$0]  %s712, 2048, %s710, %s697, 128, 128, 8
        $region52: #{tpu_custom_call.1} parent=35 // pred_fallthru
          _
      $region36: #{tpu_custom_call.1} parent=5 // pred_fallthru
        _
      %p718 = scmp.le.s32.totalorder 2, %s17
      // Predicated region
      $region53: #{tpu_custom_call.1} parent=5 // pred_check
        %p719 = pneg %p718
      $region54: #{tpu_custom_call.1} parent=5 // pred_check_branch
        %721 = sbr.rel (%p719) target = $region56
      $region55: #{tpu_custom_call.1} parent=5 // pred_region
        %s722 = ssub.s32 %s17, 2
        // Predicated region
        $region57: #{tpu_custom_call.1} parent=55 // pred_check
          %p723 = pneg %p135
        $region58: #{tpu_custom_call.1} parent=55 // pred_check_branch
          %725 = sbr.rel (%p723) target = $region60
        $region59: #{tpu_custom_call.1} parent=55 // pred_region
          %s726 = sand.u32 %s120, 1
          %s727 = scalar_lea.sflag [#allocation4], %s726
          %s728 = sand.u32 %s120, 1
          %s729 = smul.addr %s728, 128
          %s730 = scalar_lea.vmem [#allocation8], %s729
          %731 = dma.done %s727, 2048
        $region60: #{tpu_custom_call.1} parent=55 // pred_fallthru
          _
      $region56: #{tpu_custom_call.1} parent=5 // pred_fallthru
        _
    $region6: #{tpu_custom_call.1} parent=1 // loop_footer
      %s21 = sadd.s32 1, %s17
    $region7: #{tpu_custom_call.1} parent=1 // loop_footer_branch
      %16 = sbr.rel target = $region3
    $region8: #{tpu_custom_call.1} parent=1 // loop_exit
      _
    %732 = vsyncpa [#allocation3], 1
    %s733 = scalar_lea.sflag [#allocation3], 1
    %734 = vsyncpa %s733, 1
    %735 = vsyncpa [#allocation6], 1
    %736 = vsyncpa [#allocation4], 1
    %s737 = scalar_lea.sflag [#allocation4], 1
    %738 = vsyncpa %s737, 1

</llo_original>
